<compile_context>
chip_gen: v5e
topology: v5e:2x2
jax: 0.10.0
libtpu: 0.0.40
codegen_flags: <defaults>
</compile_context>

<pallas_src>
import functools

import jax
import jax.numpy as jnp
from jax.experimental import pallas as pl
from jax.experimental.pallas import tpu as pltpu


def _cin_kernel(x_ref, g_ref, b_ref, o_ref, *, inv_t):
    # x_ref: (R, Tp)   g_ref/b_ref: (R, 1)   o_ref: (R, Tp)
    x = x_ref[...].astype(jnp.float32)

    # One pass over the tile for both sums (padded lanes are zero -> no effect).
    s1 = jnp.sum(x, axis=-1, keepdims=True)          # (R, 1)
    s2 = jnp.sum(x * x, axis=-1, keepdims=True)      # (R, 1)
    mean = s1 * inv_t
    var = jnp.maximum(s2 * inv_t - mean * mean, 0.0)  # clamp tiny negatives

    inv_std = jax.lax.rsqrt(var + 1e-8)               # EUP, not a VPU divide

    gamma = g_ref[...].astype(jnp.float32)            # (R, 1)
    beta = b_ref[...].astype(jnp.float32)             # (R, 1)

    # Fold (x - mean) * inv_std * gamma + beta into a single scale/shift.
    scale = gamma * inv_std                           # (R, 1)
    shift = beta - mean * scale                       # (R, 1)
    o_ref[...] = (x * scale + shift).astype(o_ref.dtype)


def _round_up(a, m):
    return (a + m - 1) // m * m


def conditional_instance_norm(x, c, wg, bg, wb, bb, *, row_tile=256):
    """x: (B, C, T), c: (B, S). wg/wb: (S, C) (transposed nn.Linear weight),
    bg/bb: (C,). Returns (B, C, T) matching the PyTorch CIN forward."""
    B, C, T = x.shape
    rows = B * C

    # Style -> per-row affine params, computed once outside the kernel.
    gamma = (c @ wg + bg).reshape(rows, 1).astype(jnp.float32)
    beta = (c @ wb + bb).reshape(rows, 1).astype(jnp.float32)

    # Lane-dense T (multiple of 128); zero padding keeps the sums exact.
    Tp = _round_up(T, 128)

    # Row tile: multiple of 8, capped so an f32 block stays <= ~4 MiB.
    max_rows_by_vmem = max(8, ((4 << 20) // (Tp * 4)) // 8 * 8)
    R = min(row_tile, max_rows_by_vmem, _round_up(rows, 8))
    R = max(8, (R // 8) * 8)
    rows_p = _round_up(rows, R)

    xp = x.reshape(rows, T)
    if rows_p != rows or Tp != T:
        xp = jnp.pad(xp, ((0, rows_p - rows), (0, Tp - T)))
    if rows_p != rows:
        gamma = jnp.pad(gamma, ((0, rows_p - rows), (0, 0)))
        beta = jnp.pad(beta, ((0, rows_p - rows), (0, 0)))

    kernel = functools.partial(_cin_kernel, inv_t=1.0 / float(T))

    out = pl.pallas_call(
        kernel,
        out_shape=jax.ShapeDtypeStruct((rows_p, Tp), x.dtype),
        grid=(rows_p // R,),
        in_specs=[
            pl.BlockSpec((R, Tp), lambda i: (i, 0)),   # x rows
            pl.BlockSpec((R, 1), lambda i: (i, 0)),    # gamma rows
            pl.BlockSpec((R, 1), lambda i: (i, 0)),    # beta rows
        ],
        out_specs=pl.BlockSpec((R, Tp), lambda i: (i, 0)),
        compiler_params=pltpu.CompilerParams(
            dimension_semantics=("parallel",)),
    )(xp, gamma, beta)

    return out[:rows, :T].reshape(B, C, T)


def _reference(x, c, wg, bg, wb, bb):
    # Pure-JAX reference mirroring the PyTorch forward (two-pass variance).
    u = jnp.mean(x, axis=2, keepdims=True)
    var = jnp.mean((x - u) * (x - u), axis=2, keepdims=True)
    std = jnp.sqrt(var + 1e-8)
    gamma = (c @ wg + bg)[:, :, None]
    beta = (c @ wb + bb)[:, :, None]
    return (x - u) / std * gamma + beta


if __name__ == "__main__":
    # Small shapes consistent with the module: x (B, dim_in, T), c (B, style_num)
    B, C, T, S = 2, 4, 16, 8  # dim_in=4, style_num=8

    key = jax.random.PRNGKey(0)
    kx, kc, kwg, kbg, kwb, kbb = jax.random.split(key, 6)

    x = jax.random.normal(kx, (B, C, T), dtype=jnp.float32)
    c = jax.random.normal(kc, (B, S), dtype=jnp.float32)

    # Deterministic parameter init mimicking nn.Linear (uniform +-1/sqrt(in_features)).
    bound = 1.0 / jnp.sqrt(jnp.float32(S))
    # Stored already transposed to (S, C) so gamma = c @ wg + bg.
    wg = jax.random.uniform(kwg, (S, C), minval=-bound, maxval=bound, dtype=jnp.float32)
    bg = jax.random.uniform(kbg, (C,), minval=-bound, maxval=bound, dtype=jnp.float32)
    wb = jax.random.uniform(kwb, (S, C), minval=-bound, maxval=bound, dtype=jnp.float32)
    bb = jax.random.uniform(kbb, (C,), minval=-bound, maxval=bound, dtype=jnp.float32)

    out = conditional_instance_norm(x, c, wg, bg, wb, bb)
    out = jax.block_until_ready(out)

    ref = _reference(x, c, wg, bg, wb, bb)
    assert out.shape == (B, C, T)
    assert jnp.allclose(out, ref, atol=1e-4, rtol=1e-4), "mismatch vs reference"

    print("KERNEL_OK")
</pallas_src>

<mosaic_0001>
module attributes {stable_mosaic.version = 11 : i64} {
  func.func @_cin_kernel(%arg0: i32, %arg1: memref<8x128xf32, #tpu.memory_space<vmem>>, %arg2: memref<8x1xf32, #tpu.memory_space<vmem>>, %arg3: memref<8x1xf32, #tpu.memory_space<vmem>>, %arg4: memref<8x128xf32, #tpu.memory_space<vmem>>) attributes {dimension_semantics = [#tpu.dimension_semantics<parallel>], iteration_bounds = array<i64: 1>, scalar_prefetch = 0 : i64, scratch_operands = 0 : i64, tpu.core_type = #tpu.core_type<tc>, window_params = [{transform_indices = @transform_0, window_bounds = array<i64: 8, 128>}, {transform_indices = @transform_1, window_bounds = array<i64: 8, 1>}, {transform_indices = @transform_2, window_bounds = array<i64: 8, 1>}, {transform_indices = @transform_3, window_bounds = array<i64: 8, 128>}]} {
    %c0 = arith.constant 0 : index
    %c0_0 = arith.constant 0 : index
    %0 = vector.load %arg1[%c0, %c0_0] : memref<8x128xf32, #tpu.memory_space<vmem>>, vector<8x128xf32>
    %cst = arith.constant dense<0.000000e+00> : vector<8xf32>
    %1 = vector.multi_reduction <add>, %0, %cst [1] : vector<8x128xf32> to vector<8xf32>
    %2 = vector.shape_cast %1 : vector<8xf32> to vector<8x1xf32>
    %3 = arith.mulf %0, %0 : vector<8x128xf32>
    %cst_1 = arith.constant dense<0.000000e+00> : vector<8xf32>
    %4 = vector.multi_reduction <add>, %3, %cst_1 [1] : vector<8x128xf32> to vector<8xf32>
    %5 = vector.shape_cast %4 : vector<8xf32> to vector<8x1xf32>
    %cst_2 = arith.constant 6.250000e-02 : f32
    %6 = vector.broadcast %cst_2 : f32 to vector<8x1xf32>
    %7 = arith.mulf %2, %6 : vector<8x1xf32>
    %cst_3 = arith.constant 6.250000e-02 : f32
    %8 = vector.broadcast %cst_3 : f32 to vector<8x1xf32>
    %9 = arith.mulf %5, %8 : vector<8x1xf32>
    %10 = arith.mulf %7, %7 : vector<8x1xf32>
    %11 = arith.subf %9, %10 : vector<8x1xf32>
    %cst_4 = arith.constant 0.000000e+00 : f32
    %12 = vector.broadcast %cst_4 : f32 to vector<8x1xf32>
    %13 = arith.maximumf %11, %12 : vector<8x1xf32>
    %cst_5 = arith.constant 9.99999993E-9 : f32
    %14 = vector.broadcast %cst_5 : f32 to vector<8x1xf32>
    %15 = arith.addf %13, %14 : vector<8x1xf32>
    %16 = math.rsqrt %15 : vector<8x1xf32>
    %c0_6 = arith.constant 0 : index
    %c0_7 = arith.constant 0 : index
    %17 = vector.load %arg2[%c0_6, %c0_7] : memref<8x1xf32, #tpu.memory_space<vmem>>, vector<8x1xf32>
    %c0_8 = arith.constant 0 : index
    %c0_9 = arith.constant 0 : index
    %18 = vector.load %arg3[%c0_8, %c0_9] : memref<8x1xf32, #tpu.memory_space<vmem>>, vector<8x1xf32>
    %19 = arith.mulf %17, %16 : vector<8x1xf32>
    %20 = arith.mulf %7, %19 : vector<8x1xf32>
    %21 = arith.subf %18, %20 : vector<8x1xf32>
    %22 = vector.broadcast %19 : vector<8x1xf32> to vector<8x128xf32>
    %23 = arith.mulf %0, %22 : vector<8x128xf32>
    %24 = vector.broadcast %21 : vector<8x1xf32> to vector<8x128xf32>
    %25 = arith.addf %23, %24 : vector<8x128xf32>
    %c0_10 = arith.constant 0 : index
    %c0_11 = arith.constant 0 : index
    %26 = vector.load %arg4[%c0_10, %c0_11] : memref<8x128xf32, #tpu.memory_space<vmem>>, vector<8x128xf32>
    tpu.vector_store %arg4[%c0_10, %c0_11], %25 {strides = array<i32>} : memref<8x128xf32, #tpu.memory_space<vmem>>, vector<8x128xf32>,
    return
  }
  func.func @transform_0(%arg0: i32) -> (i32, i32) {
    %c0_i32 = arith.constant 0 : i32
    %c0_i32_0 = arith.constant 0 : i32
    return %arg0, %c0_i32 : i32, i32
  }
  func.func @transform_1(%arg0: i32) -> (i32, i32) {
    %c0_i32 = arith.constant 0 : i32
    %c0_i32_0 = arith.constant 0 : i32
    return %arg0, %c0_i32 : i32, i32
  }
  func.func @transform_2(%arg0: i32) -> (i32, i32) {
    %c0_i32 = arith.constant 0 : i32
    %c0_i32_0 = arith.constant 0 : i32
    return %arg0, %c0_i32 : i32, i32
  }
  func.func @transform_3(%arg0: i32) -> (i32, i32) {
    %c0_i32 = arith.constant 0 : i32
    %c0_i32_0 = arith.constant 0 : i32
    return %arg0, %c0_i32 : i32, i32
  }
}

</mosaic_0001>

<llo_original>
// kernel: tpu_custom_call.1
$region0: #{tpu_custom_call.1}
  #allocation0 [shape = 'u32[]', space=smem, size = 0x4, offset = 0x4, fixed_abs, tag = 'smem constant byte address 0x4 - core index']
  #allocation1 [shape = 'u32[72,128]{1,0:T(1,128)}', space=vmem, size = 0x9000, scoped, tag = 'internal scratch']
  %s0 = inlined_call_operand.vmem [shape: f32[8,128], index: 0, kind: input, shape index: {}]
  %s1 = inlined_call_operand.vmem [shape: f32[8,1], index: 1, kind: input, shape index: {}]
  %s2 = inlined_call_operand.vmem [shape: f32[8,1], index: 2, kind: input, shape index: {}]
  %s3 = inlined_call_operand.hbm [shape: f32[8,128], index: 3, kind: output, shape index: {}]
  %s4 = sld [smem:[#allocation0]]
  $region22: #{tpu_custom_call.1} parent=0
    _
  %s6 = ssub.s32 1, %s4
  %s7 = scalar_select 0, %s6, %s4
  $region1: #{tpu_custom_call.1} parent=0
    #allocation2 [shape = 'u8[4096]{0}', space=vmem, size = 0x1000, scoped, tag = 'output window, operand 0, single buffered']
    #allocation3 [shape = 's32[1]{0}', space=sflag, size = 0x4, scoped, tag = 'scoped memory for tpu_custom_call.1']
    %8 = vsyncpa [#allocation3], 0
    // Predicated region
    $region2: #{tpu_custom_call.1} parent=1 // pred_check
      _
    $region3: #{tpu_custom_call.1} parent=1 // pred_check_branch
      %10 = sbr.rel (0) target = $region5
    $region4: #{tpu_custom_call.1} parent=1 // pred_region
      _
    $region5: #{tpu_custom_call.1} parent=1 // pred_fallthru
      _
    // Predicated region
    $region6: #{tpu_custom_call.1} parent=1 // pred_check
      _
    $region7: #{tpu_custom_call.1} parent=1 // pred_check_branch
      %12 = sbr.rel (0) target = $region9
    $region8: #{tpu_custom_call.1} parent=1 // pred_region
      _
    $region9: #{tpu_custom_call.1} parent=1 // pred_fallthru
      _
    // Predicated region
    $region10: #{tpu_custom_call.1} parent=1 // pred_check
      _
    $region11: #{tpu_custom_call.1} parent=1 // pred_check_branch
      %14 = sbr.rel (0) target = $region13
    $region12: #{tpu_custom_call.1} parent=1 // pred_region
      _
    $region13: #{tpu_custom_call.1} parent=1 // pred_fallthru
      _
    %v15 = vld [vmem:[%s0] sm:$0xff]
    %16 = vadd.xlane.f32.xlu0 %v15
    %v17 = vpop.xlane.xlu0 %16
    %v18 = vmul.f32 %v15, %v15
    %19 = vadd.xlane.f32.xlu0 %v18
    %v20 = vpop.xlane.xlu0 %19
    %v21 = vmul.f32 %v17, 0.0625
    %v22 = vmul.f32 %v20, 0.0625
    %v23 = vmul.f32 %v21, %v21
    %v24 = vsub.f32 %v22, %v23
    %v25 = vmax.f32 %v24, 0.0
    %v26 = vadd.f32 %v25, 1e-08
    %v27 = vrsqrt.pop %v26
    %v28 = vmul.f32 %v27, %v26
    %v29 = vmul.f32 %v28, %v27
    %v30 = vmul.f32 0.5, %v29
    %v31 = vsub.f32 1.5, %v30
    %v32 = vmul.f32 %v27, %v31
    %vm33 = vweird.f32 %v26
    %vm34 = vweird.f32 %v27
    %vm35 = vmor %vm33, %vm34
    %v36 = vsel %vm35, %v27, %v32
    %v37 = vld [vmem:[%s1] sm:$0xff]
    %v38 = vld [vmem:[%s2] sm:$0xff]
    %v39 = vmul.f32 %v37, %v36
    %v40 = vmul.f32 %v21, %v39
    %v41 = vsub.f32 %v38, %v40
    %43 = vset.pattern.permute.xlu0 0
    %44 = vperm.xlu0 %43, %v39
    %v45 = vpop.permute.xlu0 %44
    %v47 = vmul.f32 %v15, %v45
    %49 = vset.pattern.permute.xlu0 0
    %50 = vperm.xlu0 %49, %v41
    %v51 = vpop.permute.xlu0 %50
    %v53 = vadd.f32 %v47, %v51
    %54 = vst [vmem:[#allocation2] sm:$0xff] %v53
    // Predicated region
    $region14: #{tpu_custom_call.1} parent=1 // pred_check
      _
    $region15: #{tpu_custom_call.1} parent=1 // pred_check_branch
      %56 = sbr.rel (0) target = $region17
    $region16: #{tpu_custom_call.1} parent=1 // pred_region
      %58 = vsyncadd [#allocation3], 0
      %s60 = sshll.u32 [#allocation2], 4
      %s61 = int_to_ptr.vmem [resolvable:$true] %s60
      %s62 = sshll.u32 %s3, 4
      %s63 = int_to_ptr.hbm [resolvable:$true] %s62
      %65 = dma.vmem_to_hbm [thread:$0]  %s61, 128, %s63, [#allocation3]
    $region17: #{tpu_custom_call.1} parent=1 // pred_fallthru
      _
    // Predicated region
    $region18: #{tpu_custom_call.1} parent=1 // pred_check
      _
    $region19: #{tpu_custom_call.1} parent=1 // pred_check_branch
      %67 = sbr.rel (0) target = $region21
    $region20: #{tpu_custom_call.1} parent=1 // pred_region
      %69 = dma.done [#allocation3], 128
    $region21: #{tpu_custom_call.1} parent=1 // pred_fallthru
      _
    %70 = vsyncpa [#allocation3], 1

</llo_original>
